<compile_context>
chip_gen: v7x
topology: tpu7x:2x2x1
jax: 0.10.0
libtpu: 0.0.40
codegen_flags: <defaults>
</compile_context>

<pallas_src>
import jax
import jax.numpy as jnp
from jax.experimental import pallas as pl
from jax.experimental.pallas import tpu as pltpu


def _round_up(x, m):
    return (x + m - 1) // m * m


def _vmem_limit(need_bytes):
    # Floor at 32 MiB (cheap everywhere), cap at v7x's 64 MiB physical VMEM.
    return int(min(max(need_bytes, 32 << 20), 64 << 20))


# ---------------------------------------------------------------------------
# Kernel 1: embedding lookup (bow=False path).
# Per grid step: gather TM rows of the VMEM-resident table via a one-hot
# (TM, V) x (V, D) matmul on the MXU (each output row has exactly one non-zero
# contribution, so values are reproduced exactly), writing a dense (TM, D) block.
# ---------------------------------------------------------------------------
def _lookup_kernel(ids_ref, table_ref, out_ref):
    ids = ids_ref[...]                                   # (TM, 1) int32
    tm = ids.shape[0]
    v = table_ref.shape[0]
    # one-hot with V on the lane (last) axis: oh[t, v] = (ids[t] == v)
    oh = (jax.lax.broadcasted_iota(jnp.int32, (tm, v), 1) == ids)
    oh = oh.astype(table_ref.dtype)
    rows = jax.lax.dot_general(
        oh, table_ref[...],
        dimension_numbers=(((1,), (0,)), ((), ())),
        preferred_element_type=jnp.float32)              # (TM, D)
    out_ref[...] = rows.astype(out_ref.dtype)


def embed_lookup(wordids, table, *, tm=128):
    B, L = wordids.shape
    V, D = table.shape
    n = B * L
    tm = min(tm, _round_up(n, 8))                        # sublane-dense, MXU-friendly
    n_pad = _round_up(n, tm)

    ids = jnp.clip(wordids.reshape(n).astype(jnp.int32), 0, V - 1)
    ids = jnp.pad(ids, (0, n_pad - n)).reshape(n_pad, 1)

    itemsize = jnp.dtype(table.dtype).itemsize
    need = (V * D * itemsize                             # resident table
            + 2 * (tm * 4 + tm * D * itemsize)           # double-buffered ids/out blocks
            + 2 * tm * V * 4                             # one-hot intermediate
            + (4 << 20))                                 # headroom

    out = pl.pallas_call(
        _lookup_kernel,
        out_shape=jax.ShapeDtypeStruct((n_pad, D), table.dtype),
        grid=(n_pad // tm,),
        in_specs=[
            pl.BlockSpec((tm, 1), lambda i: (i, 0)),     # ids chunk for this step
            pl.BlockSpec((V, D), lambda i: (0, 0)),      # full table, resident in VMEM
        ],
        out_specs=pl.BlockSpec((tm, D), lambda i: (i, 0)),
        compiler_params=pltpu.CompilerParams(
            dimension_semantics=("parallel",),
            vmem_limit_bytes=_vmem_limit(need)),
    )(ids, table)
    return out[:n].reshape(B, L, D)


# ---------------------------------------------------------------------------
# Kernel 2: bag-of-words embedding (bow=True path).
# Per grid step of BT batch rows: build counts (BT, V) with V on lanes via a
# short unrolled loop over L, contract against the resident table on the MXU,
# then scale by the reciprocal of the clamped non-pad token count.
# Equivalent to sum_l table[ids[b, l]] / max(#non-pad, 1).
# ---------------------------------------------------------------------------
def _bow_kernel(ids_ref, table_ref, out_ref):
    ids = ids_ref[...]                                   # (BT, L) int32
    bt, L = ids.shape
    v = table_ref.shape[0]

    iota_v = jax.lax.broadcasted_iota(jnp.int32, (bt, v), 1)   # V on lane axis
    counts = jnp.zeros((bt, v), jnp.float32)
    for l in range(L):                                   # L is small & static -> unrolled
        counts = counts + (iota_v == ids[:, l:l + 1]).astype(jnp.float32)

    summed = jax.lax.dot_general(
        counts.astype(table_ref.dtype), table_ref[...],
        dimension_numbers=(((1,), (0,)), ((), ())),
        preferred_element_type=jnp.float32)              # (BT, D)

    nvalid = jnp.sum((ids != 0).astype(jnp.float32), axis=1, keepdims=True)  # (BT, 1)
    nvalid = jnp.maximum(nvalid, 1.0)                    # wordsum | wordsum.eq(0)
    out_ref[...] = (summed * pl.reciprocal(nvalid, approx=False)).astype(out_ref.dtype)


def embed_bow(wordids, table, *, bt=128):
    B, L = wordids.shape
    V, D = table.shape
    bt = min(bt, _round_up(B, 8))                        # sublane-dense batch tile
    b_pad = _round_up(B, bt)

    ids = jnp.clip(wordids.astype(jnp.int32), 0, V - 1)
    ids = jnp.pad(ids, ((0, b_pad - B), (0, 0)))

    itemsize = jnp.dtype(table.dtype).itemsize
    need = (V * D * itemsize
            + 2 * (bt * L * 4 + bt * D * itemsize)
            + 2 * bt * V * 4
            + (4 << 20))

    out = pl.pallas_call(
        _bow_kernel,
        out_shape=jax.ShapeDtypeStruct((b_pad, D), table.dtype),
        grid=(b_pad // bt,),
        in_specs=[
            pl.BlockSpec((bt, L), lambda b: (b, 0)),     # ids rows for this batch tile
            pl.BlockSpec((V, D), lambda b: (0, 0)),      # full table, resident in VMEM
        ],
        out_specs=pl.BlockSpec((bt, D), lambda b: (b, 0)),
        compiler_params=pltpu.CompilerParams(
            dimension_semantics=("parallel",),
            vmem_limit_bytes=_vmem_limit(need)),
    )(ids, table)
    return out[:B]


# ---------------------------------------------------------------------------
# EmbedLayer wrapper (forward pass only).
# ---------------------------------------------------------------------------
class EmbedLayer:
    def __init__(self, num_words, dim_word, key):
        # Deterministic synthetic init of the word-embedding matrix.
        self.table = 0.1 * jax.random.normal(key, (num_words, dim_word), jnp.float32)

    def __call__(self, wordids, bow=False):
        if not bow:
            return embed_lookup(wordids, self.table)
        return embed_bow(wordids, self.table)


if __name__ == "__main__":
    key = jax.random.PRNGKey(0)
    k_tab, k_ids = jax.random.split(key)

    num_words, dim_word = 64, 128          # config.num_words, config.dim_word
    B, L = 2, 8

    layer = EmbedLayer(num_words, dim_word, k_tab)

    wordids = jax.random.randint(k_ids, (B, L), 0, num_words, dtype=jnp.int32)
    # put some pad tokens (id 0) in to exercise the bow masking/clamping
    wordids = wordids.at[0, -3:].set(0)

    # --- run kernels ---
    emb = layer(wordids, bow=False)
    bow = layer(wordids, bow=True)
    jax.block_until_ready(emb)
    jax.block_until_ready(bow)

    # --- pure-JAX reference ---
    ref_emb = layer.table[wordids]                                     # (B, L, D)
    wordsum = jnp.sum((wordids != 0).astype(jnp.float32), -1, keepdims=True)
    wordsum = jnp.maximum(wordsum, 1.0)
    ref_bow = jnp.sum(ref_emb, -2) / wordsum                           # (B, D)

    assert emb.shape == (B, L, dim_word) and bow.shape == (B, dim_word)
    assert jnp.allclose(emb, ref_emb, atol=1e-5), "lookup mismatch"
    assert jnp.allclose(bow, ref_bow, atol=1e-5), "bow mismatch"

    print("KERNEL_OK")
</pallas_src>

<mosaic_0001>
module attributes {stable_mosaic.version = 11 : i64} {
  func.func @_lookup_kernel(%arg0: i32, %arg1: memref<16x1xi32, #tpu.memory_space<vmem>>, %arg2: memref<64x128xf32, #tpu.memory_space<vmem>>, %arg3: memref<16x128xf32, #tpu.memory_space<vmem>>) attributes {dimension_semantics = [#tpu.dimension_semantics<parallel>], iteration_bounds = array<i64: 1>, scalar_prefetch = 0 : i64, scratch_operands = 0 : i64, tpu.core_type = #tpu.core_type<tc>, window_params = [{transform_indices = @transform_0, window_bounds = array<i64: 16, 1>}, {pipeline_mode = #tpu.pipeline_mode<synchronous>, transform_indices = @transform_1, window_bounds = array<i64: 64, 128>}, {transform_indices = @transform_2, window_bounds = array<i64: 16, 128>}]} {
    %c0 = arith.constant 0 : index
    %c0_0 = arith.constant 0 : index
    %0 = vector.load %arg1[%c0, %c0_0] : memref<16x1xi32, #tpu.memory_space<vmem>>, vector<16x1xi32>
    %1 = tpu.iota {dimensions = array<i32: 1>} : vector<16x64xi32>
    %2 = vector.broadcast %0 : vector<16x1xi32> to vector<16x64xi32>
    %3 = arith.cmpi eq, %1, %2 : vector<16x64xi32>
    %4 = arith.extui %3 : vector<16x64xi1> to vector<16x64xi32>
    %5 = arith.sitofp %4 : vector<16x64xi32> to vector<16x64xf32>
    %c0_1 = arith.constant 0 : index
    %c0_2 = arith.constant 0 : index
    %6 = vector.load %arg2[%c0_1, %c0_2] : memref<64x128xf32, #tpu.memory_space<vmem>>, vector<64x128xf32>
    %cst = arith.constant dense<0.000000e+00> : vector<16x128xf32>
    %7 = tpu.matmul %5, %6, %cst {dimension_numbers = #tpu.dot_dimension_numbers<[1], [0], [0], [1], [0, 0, 1, 1], [], []>} : vector<16x64xf32>, vector<64x128xf32>, vector<16x128xf32> -> vector<16x128xf32>
    %c0_3 = arith.constant 0 : index
    %c0_4 = arith.constant 0 : index
    %8 = vector.load %arg3[%c0_3, %c0_4] : memref<16x128xf32, #tpu.memory_space<vmem>>, vector<16x128xf32>
    tpu.vector_store %arg3[%c0_3, %c0_4], %7 {strides = array<i32>} : memref<16x128xf32, #tpu.memory_space<vmem>>, vector<16x128xf32>,
    return
  }
  func.func @transform_0(%arg0: i32) -> (i32, i32) {
    %c0_i32 = arith.constant 0 : i32
    %c0_i32_0 = arith.constant 0 : i32
    return %arg0, %c0_i32 : i32, i32
  }
  func.func @transform_1(%arg0: i32) -> (i32, i32) {
    %c0_i32 = arith.constant 0 : i32
    %c0_i32_0 = arith.constant 0 : i32
    %c0_i32_1 = arith.constant 0 : i32
    return %c0_i32, %c0_i32_0 : i32, i32
  }
  func.func @transform_2(%arg0: i32) -> (i32, i32) {
    %c0_i32 = arith.constant 0 : i32
    %c0_i32_0 = arith.constant 0 : i32
    return %arg0, %c0_i32 : i32, i32
  }
}

</mosaic_0001>

<llo_original>
// kernel: tpu_custom_call.1
$region0: #{tpu_custom_call.1}
  #allocation0 [shape = 'u32[]', space=smem, size = 0x4, offset = 0x4, fixed_abs, tag = 'smem constant byte address 0x4 - core index']
  #allocation1 [shape = 'u32[144,128]{1,0:T(1,128)}', space=vmem, size = 0x12000, scoped, tag = 'internal scratch']
  %s0 = inlined_call_operand.vmem [shape: s32[16,1], index: 0, kind: input, shape index: {}]
  %s1 = inlined_call_operand.hbm [shape: f32[64,128], index: 1, kind: input, shape index: {}]
  %s2 = inlined_call_operand.hbm [shape: f32[16,128], index: 2, kind: output, shape index: {}]
  %s3 = sld [smem:[#allocation0]]
  $region22: #{tpu_custom_call.1} parent=0
    _
  %s5 = ssub.s32 1, %s3
  %s6 = scalar_select 0, %s5, %s3
  $region1: #{tpu_custom_call.1} parent=0
    #allocation2 [shape = 'u8[32768]{0}', space=vmem, size = 0x8000, scoped, tag = 'input window, operand 1, single buffered']
    #allocation3 [shape = 's32[1]{0}', space=sflag, size = 0x4, scoped, tag = 'scoped memory for tpu_custom_call.1']
    #allocation4 [shape = 's32[1]{0}', space=sflag, size = 0x4, scoped, tag = 'scoped memory for tpu_custom_call.1']
    #allocation5 [shape = 'u8[8192]{0}', space=vmem, size = 0x2000, scoped, tag = 'output window, operand 0, single buffered']
    %7 = vsyncpa [#allocation3], 0
    %8 = vsyncpa [#allocation4], 0
    // Predicated region
    $region2: #{tpu_custom_call.1} parent=1 // pred_check
      _
    $region3: #{tpu_custom_call.1} parent=1 // pred_check_branch
      %10 = sbr.rel (0) target = $region5
    $region4: #{tpu_custom_call.1} parent=1 // pred_region
      _
    $region5: #{tpu_custom_call.1} parent=1 // pred_fallthru
      _
    // Predicated region
    $region6: #{tpu_custom_call.1} parent=1 // pred_check
      _
    $region7: #{tpu_custom_call.1} parent=1 // pred_check_branch
      %12 = sbr.rel (0) target = $region9
    $region8: #{tpu_custom_call.1} parent=1 // pred_region
      %s14 = ssub.s32 1024, 1024
      %15 = vsyncadd [#allocation3], %s14
      %s16 = sshll.u32 [#allocation2], 4
      %s17 = int_to_ptr.vmem [resolvable:$true] %s16
      %22 = dma.hbm_to_vmem [thread:$0]  %s1, 1024, %s17, [#allocation3], 128, 128, 8
    $region9: #{tpu_custom_call.1} parent=1 // pred_fallthru
      _
    // Predicated region
    $region10: #{tpu_custom_call.1} parent=1 // pred_check
      _
    $region11: #{tpu_custom_call.1} parent=1 // pred_check_branch
      %24 = sbr.rel (0) target = $region13
    $region12: #{tpu_custom_call.1} parent=1 // pred_region
      %25 = dma.done [#allocation3], 1024
    $region13: #{tpu_custom_call.1} parent=1 // pred_fallthru
      _
    %v26 = vld [vmem:[%s0] sm:$0xff]
    %v27 = vld [vmem:[%s0 + $0x8] sm:$0xff]
    %v28 = vlaneseq
    %v29 = vand.u32 %v28, 127
    %30 = vset.pattern.permute.xlu0 0
    %31 = vperm.xlu0 %30, %v26
    %v32 = vpop.permute.xlu0 %31
    %33 = vset.pattern.permute.xlu0 0
    %34 = vperm.xlu0 %33, %v27
    %v35 = vpop.permute.xlu0 %34
    %vm36 = vcmp.eq.s32.totalorder %v29, %v32
    %vm37 = vcmp.eq.s32.totalorder %v29, %v35
    %v38 = vsel %vm36, 1, 0
    %v39 = vsel %vm37, 1, 0
    %v40 = vcvt.s32.f32 %v38
    %v41 = vcvt.s32.f32 %v39
    %v42 = vld [vmem:[#allocation2] sm:$0xff]
    %v43 = vld [vmem:[#allocation2 + $0x8] sm:$0xff]
    %v44 = vld [vmem:[#allocation2 + $0x10] sm:$0xff]
    %v45 = vld [vmem:[#allocation2 + $0x18] sm:$0xff]
    %v46 = vld [vmem:[#allocation2 + $0x20] sm:$0xff]
    %v47 = vld [vmem:[#allocation2 + $0x28] sm:$0xff]
    %v48 = vld [vmem:[#allocation2 + $0x30] sm:$0xff]
    %v49 = vld [vmem:[#allocation2 + $0x38] sm:$0xff]
    %vm50 = vcmask 523264
    %v52 = vsel %vm50, %v40, 0
    %v55 = vsel %vm50, %v41, 0
    %57 = vmatprep.subr.mxu0 0.0
    %58 = vmatpush1.msra.mxu0 %v42
    %59 = vmatprep.subr.mxu0 0.0
    %60 = vmatpush1.msra.mxu0 %v43
    %61 = vmatprep.subr.mxu0 0.0
    %62 = vmatpush1.msra.mxu0 %v44
    %63 = vmatprep.subr.mxu0 0.0
    %64 = vmatpush1.msra.mxu0 %v45
    %65 = vmatprep.subr.mxu0 0.0
    %66 = vmatpush1.msra.mxu0 %v46
    %67 = vmatprep.subr.mxu0 0.0
    %68 = vmatpush1.msra.mxu0 %v47
    %69 = vmatprep.subr.mxu0 0.0
    %70 = vmatpush1.msra.mxu0 %v48
    %71 = vmatprep.subr.mxu0 0.0
    %72 = vmatpush1.msra.mxu0 %v49
    %73 = vmatprep.subr.mxu0 0.0
    %74 = vmatpush1.msra.mxu0 0.0
    %75 = vmatprep.subr.mxu0 0.0
    %76 = vmatpush1.msra.mxu0 0.0
    %77 = vmatprep.subr.mxu0 0.0
    %78 = vmatpush1.msra.mxu0 0.0
    %79 = vmatprep.subr.mxu0 0.0
    %80 = vmatpush1.msra.mxu0 0.0
    %81 = vmatprep.subr.mxu0 0.0
    %82 = vmatpush1.msra.mxu0 0.0
    %83 = vmatprep.subr.mxu0 0.0
    %84 = vmatpush1.msra.mxu0 0.0
    %85 = vmatprep.subr.mxu0 0.0
    %86 = vmatpush1.msra.mxu0 0.0
    %87 = vmatprep.subr.mxu0 0.0
    %88 = vmatpush1.msra.mxu0 0.0
    %89 = vmatprep.subr.mxu0 0.0
    %90 = vmatpush1.msra.mxu0 0.0
    %91 = vmatprep.subr.mxu0 0.0
    %92 = vmatpush1.msra.mxu0 0.0
    %93 = vmatprep.subr.mxu0 0.0
    %94 = vmatpush1.msra.mxu0 0.0
    %95 = vmatprep.subr.mxu0 0.0
    %96 = vmatpush1.msra.mxu0 0.0
    %97 = vmatprep.subr.mxu0 0.0
    %98 = vmatpush1.msra.mxu0 0.0
    %99 = vmatprep.subr.mxu0 0.0
    %100 = vmatpush1.msra.mxu0 0.0
    %101 = vmatprep.subr.mxu0 0.0
    %102 = vmatpush1.msra.mxu0 0.0
    %103 = vmatprep.subr.mxu0 0.0
    %104 = vmatpush1.msra.mxu0 0.0
    %105 = vmatprep.subr.mxu0 0.0
    %106 = vmatpush1.msra.mxu0 0.0
    %107 = vmatprep.subr.mxu0 0.0
    %108 = vmatpush1.msra.mxu0 0.0
    %109 = vmatprep.subr.mxu0 0.0
    %110 = vmatpush1.msra.mxu0 0.0
    %111 = vmatprep.subr.mxu0 0.0
    %112 = vmatpush1.msra.mxu0 0.0
    %113 = vmatprep.subr.mxu0 0.0
    %114 = vmatpush1.msra.mxu0 0.0
    %115 = vmatprep.subr.mxu0 0.0
    %116 = vmatpush1.msra.mxu0 0.0
    %117 = vmatprep.subr.mxu0 0.0
    %118 = vmatpush1.msra.mxu0 0.0
    %119 = vmatprep.subr.mxu0 0.0
    %120 = vmatpush1.msra.mxu0 0.0
    %121 = vmatprep.mubr.f32.mxu0 0.0
    %122 = vmatmul.mubr.f32.gmra.mrb[0].mxu0 %v52
    %v123 = vpop.f32.mrb[0].mxu0
    %v124 = vadd.f32 0.0, %v123
    %v125 = vpop.f32.mrb[0].mxu0
    %126 = vmatprep.mubr.f32.mxu0 0.0
    %127 = vmatmul.mubr.f32.gmra.mrb[0].mxu0 %v55
    %v128 = vpop.f32.mrb[0].mxu0
    %v129 = vadd.f32 0.0, %v128
    %v130 = vpop.f32.mrb[0].mxu0
    %131 = vdwg.mxu0
    %132 = vst [vmem:[#allocation5] sm:$0xff] %v124
    %133 = vst [vmem:[#allocation5 + $0x8] sm:$0xff] %v129
    // Predicated region
    $region14: #{tpu_custom_call.1} parent=1 // pred_check
      _
    $region15: #{tpu_custom_call.1} parent=1 // pred_check_branch
      %135 = sbr.rel (0) target = $region17
    $region16: #{tpu_custom_call.1} parent=1 // pred_region
      %s137 = ssub.s32 256, 256
      %138 = vsyncadd [#allocation4], %s137
      %s139 = sshll.u32 [#allocation5], 4
      %s140 = int_to_ptr.vmem [resolvable:$true] %s139
      %145 = dma.vmem_to_hbm [thread:$0]  %s140, 256, %s2, [#allocation4], 128, 128, 8
    $region17: #{tpu_custom_call.1} parent=1 // pred_fallthru
      _
    // Predicated region
    $region18: #{tpu_custom_call.1} parent=1 // pred_check
      _
    $region19: #{tpu_custom_call.1} parent=1 // pred_check_branch
      %147 = sbr.rel (0) target = $region21
    $region20: #{tpu_custom_call.1} parent=1 // pred_region
      %148 = dma.done [#allocation4], 256
    $region21: #{tpu_custom_call.1} parent=1 // pred_fallthru
      _
    %149 = vsyncpa [#allocation3], 1
    %150 = vsyncpa [#allocation4], 1

</llo_original>
